<compile_context>
chip_gen: v6e
topology: v6e:2x2x1
jax: 0.10.0
libtpu: 0.0.40
codegen_flags: <defaults>
</compile_context>

<pallas_src>
import jax
import jax.numpy as jnp
from jax.experimental import pallas as pl
from jax.experimental.pallas import tpu as pltpu

EPS = 1e-7
MARGIN = 2.0


def _make_kcl_kernel(n_valid, tn, k):
    """n_valid: true batch size N; tn: packed rows per block; k: rows packed per lane row."""

    def kernel(p1_ref, p2_ref, simi_ref, seg_ref, out_ref, acc_ref):
        i = pl.program_id(0)

        @pl.when(i == 0)
        def _init():
            acc_ref[...] = jnp.zeros_like(acc_ref)

        p1 = p1_ref[...] + EPS                         # (tn, k*C) f32
        p2 = p2_ref[...] + EPS

        # target * (log target - log predict) == target * log(target / predict)
        # (one EUP log + one divide instead of two logs)
        elem = p2 * jnp.log(p2 / p1)                   # (tn, k*C)

        # Segmented row-sum on the MXU: seg is a 0/1 block-diagonal (k*C, k) matrix,
        # so column j of the result is the KL sum of original row (packed_row*k + j).
        kld = jnp.dot(elem, seg_ref[...],
                      preferred_element_type=jnp.float32,
                      precision=jax.lax.Precision.HIGHEST)   # (tn, k)

        simi = simi_ref[...]                           # (tn, k), +1 / -1
        per_ex = jnp.where(simi > 0.0, kld, jnp.maximum(0.0, MARGIN - kld))

        # Mask rows added by padding (pack padding and tile padding).
        rows = jax.lax.broadcasted_iota(jnp.int32, per_ex.shape, 0)
        cols = jax.lax.broadcasted_iota(jnp.int32, per_ex.shape, 1)
        orig_row = (i * tn + rows) * k + cols
        masked = jnp.where(orig_row < n_valid, per_ex, 0.0)

        acc_ref[...] += jnp.sum(masked, keepdims=True)  # (1, 1) running sum

        @pl.when(i == pl.num_programs(0) - 1)
        def _finalize():
            out_ref[...] = acc_ref[...] / n_valid       # mean over the TRUE batch size

    return kernel


def kcl_loss(prob1, prob2, simi, *, block_rows=None):
    """prob1, prob2: [N, C] float; simi: [N] (+1/-1). Returns scalar f32."""
    assert prob1.ndim == 2, "Input dimension must be 2"
    n, c = prob1.shape
    assert prob2.shape == (n, c)
    assert simi.shape[0] == n, "Wrong input size"

    p1 = prob1.astype(jnp.float32)
    p2 = prob2.astype(jnp.float32)
    sm = jnp.asarray(simi, jnp.float32).reshape(-1)

    # ---- lane-dense packing: fold k rows into the lane dimension when C < 128 ----
    k = max(1, 128 // c)
    n_pad1 = ((n + k - 1) // k) * k
    if n_pad1 != n:
        p1 = jnp.pad(p1, ((0, n_pad1 - n), (0, 0)))
        p2 = jnp.pad(p2, ((0, n_pad1 - n), (0, 0)))
        sm = jnp.pad(sm, (0, n_pad1 - n), constant_values=1.0)
    n_packed = n_pad1 // k
    pc = k * c
    p1 = p1.reshape(n_packed, pc)
    p2 = p2.reshape(n_packed, pc)
    sm = sm.reshape(n_packed, k)

    # ---- tile-size selection (multiple of 8 rows, sized by a VMEM budget that fits
    #      2 inputs x 2 pipeline buffers on all of v5e / v6e / v7x) ----
    if block_rows is None:
        bytes_per_row = pc * 4
        budget = 24 * 1024 * 1024                      # pipelined-input budget
        tn = budget // (4 * bytes_per_row)             # 2 inputs x 2 buffers
        tn = max(8, (tn // 8) * 8)
        tn = min(tn, 2048)
    else:
        tn = max(8, (block_rows // 8) * 8)

    if n_packed <= tn:
        tn = n_packed                                  # single full-extent block
        nb = 1
    else:
        nb = -(-n_packed // tn)
        n_rows = nb * tn
        if n_rows != n_packed:
            pad = n_rows - n_packed
            p1 = jnp.pad(p1, ((0, pad), (0, 0)))
            p2 = jnp.pad(p2, ((0, pad), (0, 0)))
            sm = jnp.pad(sm, ((0, pad), (0, 0)), constant_values=1.0)

    # 0/1 block-diagonal segment-sum matrix: seg[l, j] = 1 iff lane l belongs to packed row j.
    seg = (jnp.arange(pc, dtype=jnp.int32)[:, None] // c
           == jnp.arange(k, dtype=jnp.int32)[None, :]).astype(jnp.float32)

    out = pl.pallas_call(
        _make_kcl_kernel(n, tn, k),
        out_shape=jax.ShapeDtypeStruct((1, 1), jnp.float32),
        grid=(nb,),
        in_specs=[
            pl.BlockSpec((tn, pc), lambda i: (i, 0)),   # prob1 tile
            pl.BlockSpec((tn, pc), lambda i: (i, 0)),   # prob2 tile
            pl.BlockSpec((tn, k), lambda i: (i, 0)),    # simi tile
            pl.BlockSpec((pc, k), lambda i: (0, 0)),    # segment matrix (fetched once)
        ],
        out_specs=pl.BlockSpec((1, 1), lambda i: (0, 0)),
        scratch_shapes=[pltpu.VMEM((1, 1), jnp.float32)],   # running-sum accumulator
        compiler_params=pltpu.CompilerParams(
            dimension_semantics=("arbitrary",),             # serial accumulation axis
            vmem_limit_bytes=48 * 1024 * 1024,
        ),
    )(p1, p2, sm, seg)
    return out[0, 0]


def kcl_reference(prob1, prob2, simi):
    """Pure-JAX faithful translation of the PyTorch module."""
    p1 = prob1.astype(jnp.float32) + EPS
    p2 = prob2.astype(jnp.float32) + EPS
    kld = jnp.sum(p2 * (jnp.log(p2) - jnp.log(p1)), axis=1)
    simi = simi.astype(jnp.float32)
    per = jnp.where(simi > 0.0, kld, jnp.maximum(0.0, MARGIN - kld))
    return jnp.mean(per)


if __name__ == "__main__":
    keys = jax.random.split(jax.random.PRNGKey(0), 6)

    def run_case(n, c, ks, **kw):
        k1, k2, k3 = ks
        prob1 = jax.nn.softmax(jax.random.normal(k1, (n, c), jnp.float32), axis=1)
        prob2 = jax.nn.softmax(jax.random.normal(k2, (n, c), jnp.float32), axis=1)
        simi = jnp.where(jax.random.bernoulli(k3, 0.5, (n,)), 1.0, -1.0).astype(jnp.float32)
        out = jax.block_until_ready(kcl_loss(prob1, prob2, simi, **kw))
        ref = kcl_reference(prob1, prob2, simi)
        assert jnp.allclose(out, ref, atol=1e-5, rtol=1e-5), (n, c, out, ref)

    # N not a multiple of the pack factor (k=4 for C=32): exercises row masking.
    run_case(37, 32, keys[0:3])
    # Forced small tile: exercises multi-block grid accumulation + tile padding.
    run_case(300, 32, keys[3:6], block_rows=16)

    print("KERNEL_OK")
</pallas_src>

<mosaic_0001>
module attributes {stable_mosaic.version = 11 : i64} {
  func.func @kernel(%arg0: i32, %arg1: memref<10x128xf32, #tpu.memory_space<vmem>>, %arg2: memref<10x128xf32, #tpu.memory_space<vmem>>, %arg3: memref<10x4xf32, #tpu.memory_space<vmem>>, %arg4: memref<128x4xf32, #tpu.memory_space<vmem>>, %arg5: memref<1x1xf32, #tpu.memory_space<vmem>>, %arg6: memref<1x1xf32, #tpu.memory_space<vmem>>) attributes {dimension_semantics = [#tpu.dimension_semantics<arbitrary>], iteration_bounds = array<i64: 1>, scalar_prefetch = 0 : i64, scratch_operands = 1 : i64, tpu.core_type = #tpu.core_type<tc>, window_params = [{transform_indices = @transform_0, window_bounds = array<i64: 10, 128>}, {transform_indices = @transform_1, window_bounds = array<i64: 10, 128>}, {transform_indices = @transform_2, window_bounds = array<i64: 10, 4>}, {pipeline_mode = #tpu.pipeline_mode<synchronous>, transform_indices = @transform_3, window_bounds = array<i64: 128, 4>}, {pipeline_mode = #tpu.pipeline_mode<synchronous>, transform_indices = @transform_4, window_bounds = array<i64: 1, 1>}]} {
    %c0_i32 = arith.constant 0 : i32
    %0 = arith.cmpi eq, %arg0, %c0_i32 : i32
    %1 = arith.extui %0 : i1 to i32
    %c0_i32_0 = arith.constant 0 : i32
    %2 = arith.cmpi ne, %1, %c0_i32_0 : i32
    scf.if %2 {
      %cst_21 = arith.constant 0.000000e+00 : f32
      %45 = vector.broadcast %cst_21 : f32 to vector<1x1xf32>
      %c0_22 = arith.constant 0 : index
      %c0_23 = arith.constant 0 : index
      %46 = vector.load %arg6[%c0_22, %c0_23] : memref<1x1xf32, #tpu.memory_space<vmem>>, vector<1x1xf32>
      tpu.vector_store %arg6[%c0_22, %c0_23], %45 {strides = array<i32>} : memref<1x1xf32, #tpu.memory_space<vmem>>, vector<1x1xf32>,
    } else {
    }
    %c0 = arith.constant 0 : index
    %c0_1 = arith.constant 0 : index
    %3 = vector.load %arg1[%c0, %c0_1] : memref<10x128xf32, #tpu.memory_space<vmem>>, vector<10x128xf32>
    %cst = arith.constant 1.000000e-07 : f32
    %4 = vector.broadcast %cst : f32 to vector<10x128xf32>
    %5 = arith.addf %3, %4 : vector<10x128xf32>
    %c0_2 = arith.constant 0 : index
    %c0_3 = arith.constant 0 : index
    %6 = vector.load %arg2[%c0_2, %c0_3] : memref<10x128xf32, #tpu.memory_space<vmem>>, vector<10x128xf32>
    %cst_4 = arith.constant 1.000000e-07 : f32
    %7 = vector.broadcast %cst_4 : f32 to vector<10x128xf32>
    %8 = arith.addf %6, %7 : vector<10x128xf32>
    %9 = arith.divf %8, %5 : vector<10x128xf32>
    %10 = math.log %9 : vector<10x128xf32>
    %11 = arith.mulf %8, %10 : vector<10x128xf32>
    %c0_5 = arith.constant 0 : index
    %c0_6 = arith.constant 0 : index
    %12 = vector.load %arg4[%c0_5, %c0_6] : memref<128x4xf32, #tpu.memory_space<vmem>>, vector<128x4xf32>
    %cst_7 = arith.constant dense<0.000000e+00> : vector<10x4xf32>
    %13 = tpu.matmul %11, %12, %cst_7 {dimension_numbers = #tpu.dot_dimension_numbers<[1], [0], [0], [1], [0, 0, 1, 1], [], []>, precision = #tpu.contract_precision<fp32>} : vector<10x128xf32>, vector<128x4xf32>, vector<10x4xf32> -> vector<10x4xf32>
    %c0_8 = arith.constant 0 : index
    %c0_9 = arith.constant 0 : index
    %14 = vector.load %arg3[%c0_8, %c0_9] : memref<10x4xf32, #tpu.memory_space<vmem>>, vector<10x4xf32>
    %cst_10 = arith.constant 0.000000e+00 : f32
    %15 = vector.broadcast %cst_10 : f32 to vector<10x4xf32>
    %16 = arith.cmpf ogt, %14, %15 : vector<10x4xf32>
    %cst_11 = arith.constant 2.000000e+00 : f32
    %17 = vector.broadcast %cst_11 : f32 to vector<10x4xf32>
    %18 = arith.subf %17, %13 : vector<10x4xf32>
    %cst_12 = arith.constant 0.000000e+00 : f32
    %19 = vector.broadcast %cst_12 : f32 to vector<10x4xf32>
    %20 = arith.maximumf %19, %18 : vector<10x4xf32>
    %21 = arith.select %16, %13, %20 : vector<10x4xi1>, vector<10x4xf32>
    %22 = tpu.iota {dimensions = array<i32: 0>} : vector<10x4xi32>
    %23 = tpu.iota {dimensions = array<i32: 1>} : vector<10x4xi32>
    %c10_i32 = arith.constant 10 : i32
    %24 = arith.muli %arg0, %c10_i32 : i32
    %25 = vector.broadcast %24 : i32 to vector<10x4xi32>
    %26 = arith.addi %25, %22 : vector<10x4xi32>
    %c4_i32 = arith.constant 4 : i32
    %27 = vector.broadcast %c4_i32 : i32 to vector<10x4xi32>
    %28 = arith.muli %26, %27 : vector<10x4xi32>
    %29 = arith.addi %28, %23 : vector<10x4xi32>
    %c37_i32 = arith.constant 37 : i32
    %30 = vector.broadcast %c37_i32 : i32 to vector<10x4xi32>
    %31 = arith.cmpi slt, %29, %30 : vector<10x4xi32>
    %cst_13 = arith.constant 0.000000e+00 : f32
    %32 = vector.broadcast %cst_13 : f32 to vector<10x4xf32>
    %33 = arith.select %31, %21, %32 : vector<10x4xi1>, vector<10x4xf32>
    %c0_14 = arith.constant 0 : index
    %c0_15 = arith.constant 0 : index
    %34 = vector.load %arg6[%c0_14, %c0_15] : memref<1x1xf32, #tpu.memory_space<vmem>>, vector<1x1xf32>
    %35 = vector.shape_cast %33 : vector<10x4xf32> to vector<1x10x4xf32>
    %cst_16 = arith.constant dense<0.000000e+00> : vector<1xf32>
    %36 = vector.multi_reduction <add>, %35, %cst_16 [1, 2] : vector<1x10x4xf32> to vector<1xf32>
    %37 = vector.shape_cast %36 : vector<1xf32> to vector<1x1x1xf32>
    %38 = vector.extract %37[0, 0, 0] : f32 from vector<1x1x1xf32>
    %39 = vector.broadcast %38 : f32 to vector<1x1xf32>
    %40 = arith.addf %34, %39 : vector<1x1xf32>
    %c0_17 = arith.constant 0 : index
    %c0_18 = arith.constant 0 : index
    %41 = vector.load %arg6[%c0_17, %c0_18] : memref<1x1xf32, #tpu.memory_space<vmem>>, vector<1x1xf32>
    tpu.vector_store %arg6[%c0_17, %c0_18], %40 {strides = array<i32>} : memref<1x1xf32, #tpu.memory_space<vmem>>, vector<1x1xf32>,
    %c0_i32_19 = arith.constant 0 : i32
    %42 = arith.cmpi eq, %arg0, %c0_i32_19 : i32
    %43 = arith.extui %42 : i1 to i32
    %c0_i32_20 = arith.constant 0 : i32
    %44 = arith.cmpi ne, %43, %c0_i32_20 : i32
    scf.if %44 {
      %c0_21 = arith.constant 0 : index
      %c0_22 = arith.constant 0 : index
      %45 = vector.load %arg6[%c0_21, %c0_22] : memref<1x1xf32, #tpu.memory_space<vmem>>, vector<1x1xf32>
      %cst_23 = arith.constant 3.700000e+01 : f32
      %46 = vector.broadcast %cst_23 : f32 to vector<1x1xf32>
      %47 = arith.divf %45, %46 : vector<1x1xf32>
      %c0_24 = arith.constant 0 : index
      %c0_25 = arith.constant 0 : index
      %48 = vector.load %arg5[%c0_24, %c0_25] : memref<1x1xf32, #tpu.memory_space<vmem>>, vector<1x1xf32>
      tpu.vector_store %arg5[%c0_24, %c0_25], %47 {strides = array<i32>} : memref<1x1xf32, #tpu.memory_space<vmem>>, vector<1x1xf32>,
    } else {
    }
    return
  }
  func.func @transform_0(%arg0: i32) -> (i32, i32) {
    %c0_i32 = arith.constant 0 : i32
    %c0_i32_0 = arith.constant 0 : i32
    return %arg0, %c0_i32 : i32, i32
  }
  func.func @transform_1(%arg0: i32) -> (i32, i32) {
    %c0_i32 = arith.constant 0 : i32
    %c0_i32_0 = arith.constant 0 : i32
    return %arg0, %c0_i32 : i32, i32
  }
  func.func @transform_2(%arg0: i32) -> (i32, i32) {
    %c0_i32 = arith.constant 0 : i32
    %c0_i32_0 = arith.constant 0 : i32
    return %arg0, %c0_i32 : i32, i32
  }
  func.func @transform_3(%arg0: i32) -> (i32, i32) {
    %c0_i32 = arith.constant 0 : i32
    %c0_i32_0 = arith.constant 0 : i32
    %c0_i32_1 = arith.constant 0 : i32
    return %c0_i32, %c0_i32_0 : i32, i32
  }
  func.func @transform_4(%arg0: i32) -> (i32, i32) {
    %c0_i32 = arith.constant 0 : i32
    %c0_i32_0 = arith.constant 0 : i32
    %c0_i32_1 = arith.constant 0 : i32
    return %c0_i32, %c0_i32_0 : i32, i32
  }
}

</mosaic_0001>

<llo_original>
// kernel: tpu_custom_call.1
$region0: #{tpu_custom_call.1}
  #allocation0 [shape = 'u32[]', space=smem, size = 0x4, offset = 0x4, fixed_abs, tag = 'smem constant byte address 0x4 - core index']
  #allocation1 [shape = 'u32[144,128]{1,0:T(1,128)}', space=vmem, size = 0x12000, scoped, tag = 'internal scratch']
  #allocation2 [shape = 'f32[1,1]{1,0:T(1,128)}', space=vmem, size = 0x200, scoped, tag = 'scratch operand']
  %s0 = inlined_call_operand.vmem [shape: f32[10,128], index: 0, kind: input, shape index: {}]
  %s1 = inlined_call_operand.vmem [shape: f32[10,128], index: 1, kind: input, shape index: {}]
  %s2 = inlined_call_operand.vmem [shape: f32[10,4], index: 2, kind: input, shape index: {}]
  %s3 = inlined_call_operand.vmem [shape: f32[128,4], index: 3, kind: input, shape index: {}]
  %s4 = inlined_call_operand.hbm [shape: f32[1,1], index: 4, kind: output, shape index: {}]
  %s5 = sld [smem:[#allocation0]]
  $region34: #{tpu_custom_call.1} parent=0
    _
  %s7 = ssub.s32 1, %s5
  %s8 = scalar_select 0, %s7, %s5
  $region1: #{tpu_custom_call.1} parent=0
    #allocation3 [shape = 'u8[512]{0}', space=vmem, size = 0x400, scoped, tag = 'output window, operand 0, single buffered']
    #allocation4 [shape = 's32[1]{0}', space=sflag, size = 0x4, scoped, tag = 'scoped memory for tpu_custom_call.1']
    %9 = vsyncpa [#allocation4], 0
    // Predicated region
    $region2: #{tpu_custom_call.1} parent=1 // pred_check
      _
    $region3: #{tpu_custom_call.1} parent=1 // pred_check_branch
      %11 = sbr.rel (0) target = $region5
    $region4: #{tpu_custom_call.1} parent=1 // pred_region
      _
    $region5: #{tpu_custom_call.1} parent=1 // pred_fallthru
      _
    // Predicated region
    $region6: #{tpu_custom_call.1} parent=1 // pred_check
      _
    $region7: #{tpu_custom_call.1} parent=1 // pred_check_branch
      %13 = sbr.rel (0) target = $region9
    $region8: #{tpu_custom_call.1} parent=1 // pred_region
      _
    $region9: #{tpu_custom_call.1} parent=1 // pred_fallthru
      _
    // Predicated region
    $region10: #{tpu_custom_call.1} parent=1 // pred_check
      _
    $region11: #{tpu_custom_call.1} parent=1 // pred_check_branch
      %15 = sbr.rel (0) target = $region13
    $region12: #{tpu_custom_call.1} parent=1 // pred_region
      _
    $region13: #{tpu_custom_call.1} parent=1 // pred_fallthru
      _
    // Predicated region
    $region14: #{tpu_custom_call.1} parent=1 // pred_check
      _
    $region15: #{tpu_custom_call.1} parent=1 // pred_check_branch
      %17 = sbr.rel (0) target = $region17
    $region16: #{tpu_custom_call.1} parent=1 // pred_region
      _
    $region17: #{tpu_custom_call.1} parent=1 // pred_fallthru
      _
    %p18 = scmp.eq.s32.totalorder 0, 0
    // Predicated region
    $region18: #{tpu_custom_call.1} parent=1 // pred_check
      %p19 = pneg %p18
    $region19: #{tpu_custom_call.1} parent=1 // pred_check_branch
      %21 = sbr.rel (%p19) target = $region21
    $region20: #{tpu_custom_call.1} parent=1 // pred_region
      %vm22 = vcmask 0
      %23 = vst.msk [vmem:[#allocation2] sm:$0x1] %vm22, 0.0
    $region21: #{tpu_custom_call.1} parent=1 // pred_fallthru
      _
    %v24 = vld [vmem:[%s0] sm:$0xff]
    %v25 = vld [vmem:[%s0 + $0x8] sm:$0x3]
    %v26 = vadd.f32 %v24, 1e-07
    %v27 = vadd.f32 %v25, 1e-07
    %v28 = vld [vmem:[%s1] sm:$0xff]
    %v29 = vld [vmem:[%s1 + $0x8] sm:$0x3]
    %v30 = vadd.f32 %v28, 1e-07
    %v31 = vadd.f32 %v29, 1e-07
    %v32 = vrcp.pop %v26
    %v33 = vmul.f32 %v30, %v32
    %v34 = vrcp.pop %v27
    %v35 = vmul.f32 %v31, %v34
    %v36 = vlog2.pop %v33
    %v37 = vmul.f32 %v36, 0.6931472
    %v38 = vlog2.pop %v35
    %v39 = vmul.f32 %v38, 0.6931472
    %v40 = vmul.f32 %v30, %v37
    %v41 = vmul.f32 %v31, %v39
    %v42 = vld [vmem:[%s3] sm:$0xff]
    %v43 = vld [vmem:[%s3 + $0x8] sm:$0xff]
    %v44 = vld [vmem:[%s3 + $0x10] sm:$0xff]
    %v45 = vld [vmem:[%s3 + $0x18] sm:$0xff]
    %v46 = vld [vmem:[%s3 + $0x20] sm:$0xff]
    %v47 = vld [vmem:[%s3 + $0x28] sm:$0xff]
    %v48 = vld [vmem:[%s3 + $0x30] sm:$0xff]
    %v49 = vld [vmem:[%s3 + $0x38] sm:$0xff]
    %v50 = vld [vmem:[%s3 + $0x40] sm:$0xff]
    %v51 = vld [vmem:[%s3 + $0x48] sm:$0xff]
    %v52 = vld [vmem:[%s3 + $0x50] sm:$0xff]
    %v53 = vld [vmem:[%s3 + $0x58] sm:$0xff]
    %v54 = vld [vmem:[%s3 + $0x60] sm:$0xff]
    %v55 = vld [vmem:[%s3 + $0x68] sm:$0xff]
    %v56 = vld [vmem:[%s3 + $0x70] sm:$0xff]
    %v57 = vld [vmem:[%s3 + $0x78] sm:$0xff]
    %58 = vmatprep.subr.mxu0 0.0
    %v59 = vand.u32 %v57, 4294901760
    %60 = vmatpush1.msra.mxu0 %v59
    %61 = vmatprep.subr.mxu0 0.0
    %v62 = vand.u32 %v56, 4294901760
    %63 = vmatpush1.msra.mxu0 %v62
    %64 = vmatprep.subr.mxu0 0.0
    %v65 = vand.u32 %v55, 4294901760
    %66 = vmatpush1.msra.mxu0 %v65
    %67 = vmatprep.subr.mxu0 0.0
    %v68 = vand.u32 %v54, 4294901760
    %69 = vmatpush1.msra.mxu0 %v68
    %70 = vmatprep.subr.mxu0 0.0
    %v71 = vand.u32 %v53, 4294901760
    %72 = vmatpush1.msra.mxu0 %v71
    %73 = vmatprep.subr.mxu0 0.0
    %v74 = vand.u32 %v52, 4294901760
    %75 = vmatpush1.msra.mxu0 %v74
    %76 = vmatprep.subr.mxu0 0.0
    %v77 = vand.u32 %v51, 4294901760
    %78 = vmatpush1.msra.mxu0 %v77
    %79 = vmatprep.subr.mxu0 0.0
    %v80 = vand.u32 %v50, 4294901760
    %81 = vmatpush1.msra.mxu0 %v80
    %82 = vmatprep.subr.mxu0 0.0
    %v83 = vand.u32 %v49, 4294901760
    %84 = vmatpush1.msra.mxu0 %v83
    %85 = vmatprep.subr.mxu0 0.0
    %v86 = vand.u32 %v48, 4294901760
    %87 = vmatpush1.msra.mxu0 %v86
    %88 = vmatprep.subr.mxu0 0.0
    %v89 = vand.u32 %v47, 4294901760
    %90 = vmatpush1.msra.mxu0 %v89
    %91 = vmatprep.subr.mxu0 0.0
    %v92 = vand.u32 %v46, 4294901760
    %93 = vmatpush1.msra.mxu0 %v92
    %94 = vmatprep.subr.mxu0 0.0
    %v95 = vand.u32 %v45, 4294901760
    %96 = vmatpush1.msra.mxu0 %v95
    %97 = vmatprep.subr.mxu0 0.0
    %v98 = vand.u32 %v44, 4294901760
    %99 = vmatpush1.msra.mxu0 %v98
    %100 = vmatprep.subr.mxu0 0.0
    %v101 = vand.u32 %v43, 4294901760
    %102 = vmatpush1.msra.mxu0 %v101
    %103 = vmatprep.subr.mxu0 0.0
    %v104 = vand.u32 %v42, 4294901760
    %105 = vmatpush1.msra.mxu0 %v104
    %106 = vmatprep.subr.mxu0 0.0
    %107 = vmatpush2.msra.mxu0 0.0
    %108 = vmatprep.subr.mxu0 0.0
    %109 = vmatpush2.msra.mxu0 0.0
    %110 = vmatprep.subr.mxu0 0.0
    %111 = vmatpush2.msra.mxu0 0.0
    %112 = vmatprep.subr.mxu0 0.0
    %113 = vmatpush2.msra.mxu0 0.0
    %114 = vmatprep.subr.mxu0 0.0
    %115 = vmatpush2.msra.mxu0 0.0
    %116 = vmatprep.subr.mxu0 0.0
    %117 = vmatpush2.msra.mxu0 0.0
    %118 = vmatprep.subr.mxu0 0.0
    %119 = vmatpush2.msra.mxu0 0.0
    %120 = vmatprep.subr.mxu0 0.0
    %121 = vmatpush2.msra.mxu0 0.0
    %122 = vmatprep.subr.mxu0 0.0
    %123 = vmatpush2.msra.mxu0 0.0
    %124 = vmatprep.subr.mxu0 0.0
    %125 = vmatpush2.msra.mxu0 0.0
    %126 = vmatprep.subr.mxu0 0.0
    %127 = vmatpush2.msra.mxu0 0.0
    %128 = vmatprep.subr.mxu0 0.0
    %129 = vmatpush2.msra.mxu0 0.0
    %130 = vmatprep.subr.mxu0 0.0
    %131 = vmatpush2.msra.mxu0 0.0
    %132 = vmatprep.subr.mxu0 0.0
    %133 = vmatpush2.msra.mxu0 0.0
    %134 = vmatprep.subr.mxu0 0.0
    %135 = vmatpush2.msra.mxu0 0.0
    %136 = vmatprep.subr.mxu0 0.0
    %137 = vmatpush2.msra.mxu0 0.0
    %138 = vmatprep.mubr.f32.mxu0 0.0
    %v139 = vand.u32 %v40, 4294901760
    %v140 = vsub.f32 %v40, %v139
    %v141 = vand.u32 %v140, 4294901760
    %v142 = vsub.f32 %v140, %v141
    %v143 = vand.u32 %v142, 4294901760
    %144 = vmatmul.mubr.f32.gmra.mxu0 %v143
    %v145 = vpop.f32.mrf.mxu0
    %v146 = vadd.f32 0.0, %v145
    %v147 = vpop.f32.mrf.mxu0
    %148 = vmatprep.mubr.f32.mxu0 0.0
    %v149 = vand.u32 %v41, 4294901760
    %v150 = vsub.f32 %v41, %v149
    %v151 = vand.u32 %v150, 4294901760
    %v152 = vsub.f32 %v150, %v151
    %v153 = vand.u32 %v152, 4294901760
    %154 = vmatmul.mubr.f32.gmra.mxu0 %v153
    %v155 = vpop.f32.mrf.mxu0
    %v156 = vadd.f32 0.0, %v155
    %v157 = vpop.f32.mrf.mxu0
    %158 = vdwg.mxu0
    %159 = vmatprep.subr.mxu0 0.0
    %v160 = vand.u32 %v57, 4294901760
    %v161 = vsub.f32 %v57, %v160
    %v162 = vand.u32 %v161, 4294901760
    %v163 = vsub.f32 %v161, %v162
    %v164 = vand.u32 %v163, 4294901760
    %165 = vmatpush1.msra.mxu0 %v164
    %166 = vmatprep.subr.mxu0 0.0
    %v167 = vand.u32 %v56, 4294901760
    %v168 = vsub.f32 %v56, %v167
    %v169 = vand.u32 %v168, 4294901760
    %v170 = vsub.f32 %v168, %v169
    %v171 = vand.u32 %v170, 4294901760
    %172 = vmatpush1.msra.mxu0 %v171
    %173 = vmatprep.subr.mxu0 0.0
    %v174 = vand.u32 %v55, 4294901760
    %v175 = vsub.f32 %v55, %v174
    %v176 = vand.u32 %v175, 4294901760
    %v177 = vsub.f32 %v175, %v176
    %v178 = vand.u32 %v177, 4294901760
    %179 = vmatpush1.msra.mxu0 %v178
    %180 = vmatprep.subr.mxu0 0.0
    %v181 = vand.u32 %v54, 4294901760
    %v182 = vsub.f32 %v54, %v181
    %v183 = vand.u32 %v182, 4294901760
    %v184 = vsub.f32 %v182, %v183
    %v185 = vand.u32 %v184, 4294901760
    %186 = vmatpush1.msra.mxu0 %v185
    %187 = vmatprep.subr.mxu0 0.0
    %v188 = vand.u32 %v53, 4294901760
    %v189 = vsub.f32 %v53, %v188
    %v190 = vand.u32 %v189, 4294901760
    %v191 = vsub.f32 %v189, %v190
    %v192 = vand.u32 %v191, 4294901760
    %193 = vmatpush1.msra.mxu0 %v192
    %194 = vmatprep.subr.mxu0 0.0
    %v195 = vand.u32 %v52, 4294901760
    %v196 = vsub.f32 %v52, %v195
    %v197 = vand.u32 %v196, 4294901760
    %v198 = vsub.f32 %v196, %v197
    %v199 = vand.u32 %v198, 4294901760
    %200 = vmatpush1.msra.mxu0 %v199
    %201 = vmatprep.subr.mxu0 0.0
    %v202 = vand.u32 %v51, 4294901760
    %v203 = vsub.f32 %v51, %v202
    %v204 = vand.u32 %v203, 4294901760
    %v205 = vsub.f32 %v203, %v204
    %v206 = vand.u32 %v205, 4294901760
    %207 = vmatpush1.msra.mxu0 %v206
    %208 = vmatprep.subr.mxu0 0.0
    %v209 = vand.u32 %v50, 4294901760
    %v210 = vsub.f32 %v50, %v209
    %v211 = vand.u32 %v210, 4294901760
    %v212 = vsub.f32 %v210, %v211
    %v213 = vand.u32 %v212, 4294901760
    %214 = vmatpush1.msra.mxu0 %v213
    %215 = vmatprep.subr.mxu0 0.0
    %v216 = vand.u32 %v49, 4294901760
    %v217 = vsub.f32 %v49, %v216
    %v218 = vand.u32 %v217, 4294901760
    %v219 = vsub.f32 %v217, %v218
    %v220 = vand.u32 %v219, 4294901760
    %221 = vmatpush1.msra.mxu0 %v220
    %222 = vmatprep.subr.mxu0 0.0
    %v223 = vand.u32 %v48, 4294901760
    %v224 = vsub.f32 %v48, %v223
    %v225 = vand.u32 %v224, 4294901760
    %v226 = vsub.f32 %v224, %v225
    %v227 = vand.u32 %v226, 4294901760
    %228 = vmatpush1.msra.mxu0 %v227
    %229 = vmatprep.subr.mxu0 0.0
    %v230 = vand.u32 %v47, 4294901760
    %v231 = vsub.f32 %v47, %v230
    %v232 = vand.u32 %v231, 4294901760
    %v233 = vsub.f32 %v231, %v232
    %v234 = vand.u32 %v233, 4294901760
    %235 = vmatpush1.msra.mxu0 %v234
    %236 = vmatprep.subr.mxu0 0.0
    %v237 = vand.u32 %v46, 4294901760
    %v238 = vsub.f32 %v46, %v237
    %v239 = vand.u32 %v238, 4294901760
    %v240 = vsub.f32 %v238, %v239
    %v241 = vand.u32 %v240, 4294901760
    %242 = vmatpush1.msra.mxu0 %v241
    %243 = vmatprep.subr.mxu0 0.0
    %v244 = vand.u32 %v45, 4294901760
    %v245 = vsub.f32 %v45, %v244
    %v246 = vand.u32 %v245, 4294901760
    %v247 = vsub.f32 %v245, %v246
    %v248 = vand.u32 %v247, 4294901760
    %249 = vmatpush1.msra.mxu0 %v248
    %250 = vmatprep.subr.mxu0 0.0
    %v251 = vand.u32 %v44, 4294901760
    %v252 = vsub.f32 %v44, %v251
    %v253 = vand.u32 %v252, 4294901760
    %v254 = vsub.f32 %v252, %v253
    %v255 = vand.u32 %v254, 4294901760
    %256 = vmatpush1.msra.mxu0 %v255
    %257 = vmatprep.subr.mxu0 0.0
    %v258 = vand.u32 %v43, 4294901760
    %v259 = vsub.f32 %v43, %v258
    %v260 = vand.u32 %v259, 4294901760
    %v261 = vsub.f32 %v259, %v260
    %v262 = vand.u32 %v261, 4294901760
    %263 = vmatpush1.msra.mxu0 %v262
    %264 = vmatprep.subr.mxu0 0.0
    %v265 = vand.u32 %v42, 4294901760
    %v266 = vsub.f32 %v42, %v265
    %v267 = vand.u32 %v266, 4294901760
    %v268 = vsub.f32 %v266, %v267
    %v269 = vand.u32 %v268, 4294901760
    %270 = vmatpush1.msra.mxu0 %v269
    %271 = vmatprep.subr.mxu0 0.0
    %272 = vmatpush2.msra.mxu0 0.0
    %273 = vmatprep.subr.mxu0 0.0
    %274 = vmatpush2.msra.mxu0 0.0
    %275 = vmatprep.subr.mxu0 0.0
    %276 = vmatpush2.msra.mxu0 0.0
    %277 = vmatprep.subr.mxu0 0.0
    %278 = vmatpush2.msra.mxu0 0.0
    %279 = vmatprep.subr.mxu0 0.0
    %280 = vmatpush2.msra.mxu0 0.0
    %281 = vmatprep.subr.mxu0 0.0
    %282 = vmatpush2.msra.mxu0 0.0
    %283 = vmatprep.subr.mxu0 0.0
    %284 = vmatpush2.msra.mxu0 0.0
    %285 = vmatprep.subr.mxu0 0.0
    %286 = vmatpush2.msra.mxu0 0.0
    %287 = vmatprep.subr.mxu0 0.0
    %288 = vmatpush2.msra.mxu0 0.0
    %289 = vmatprep.subr.mxu0 0.0
    %290 = vmatpush2.msra.mxu0 0.0
    %291 = vmatprep.subr.mxu0 0.0
    %292 = vmatpush2.msra.mxu0 0.0
    %293 = vmatprep.subr.mxu0 0.0
    %294 = vmatpush2.msra.mxu0 0.0
    %295 = vmatprep.subr.mxu0 0.0
    %296 = vmatpush2.msra.mxu0 0.0
    %297 = vmatprep.subr.mxu0 0.0
    %298 = vmatpush2.msra.mxu0 0.0
    %299 = vmatprep.subr.mxu0 0.0
    %300 = vmatpush2.msra.mxu0 0.0
    %301 = vmatprep.subr.mxu0 0.0
    %302 = vmatpush2.msra.mxu0 0.0
    %303 = vmatprep.mubr.f32.mxu0 0.0
    %v304 = vand.u32 %v40, 4294901760
    %305 = vmatmul.mubr.f32.gmra.mxu0 %v304
    %v306 = vpop.f32.mrf.mxu0
    %v307 = vadd.f32 %v146, %v306
    %v308 = vpop.f32.mrf.mxu0
    %309 = vmatprep.mubr.f32.mxu0 0.0
    %v310 = vand.u32 %v41, 4294901760
    %311 = vmatmul.mubr.f32.gmra.mxu0 %v310
    %v312 = vpop.f32.mrf.mxu0
    %v313 = vadd.f32 %v156, %v312
    %v314 = vpop.f32.mrf.mxu0
    %315 = vdwg.mxu0
    %316 = vmatprep.subr.mxu0 0.0
    %v317 = vand.u32 %v57, 4294901760
    %v318 = vsub.f32 %v57, %v317
    %319 = vmatpush1.msra.mxu0 %v318
    %320 = vmatprep.subr.mxu0 0.0
    %v321 = vand.u32 %v56, 4294901760
    %v322 = vsub.f32 %v56, %v321
    %323 = vmatpush1.msra.mxu0 %v322
    %324 = vmatprep.subr.mxu0 0.0
    %v325 = vand.u32 %v55, 4294901760
    %v326 = vsub.f32 %v55, %v325
    %327 = vmatpush1.msra.mxu0 %v326
    %328 = vmatprep.subr.mxu0 0.0
    %v329 = vand.u32 %v54, 4294901760
    %v330 = vsub.f32 %v54, %v329
    %331 = vmatpush1.msra.mxu0 %v330
    %332 = vmatprep.subr.mxu0 0.0
    %v333 = vand.u32 %v53, 4294901760
    %v334 = vsub.f32 %v53, %v333
    %335 = vmatpush1.msra.mxu0 %v334
    %336 = vmatprep.subr.mxu0 0.0
    %v337 = vand.u32 %v52, 4294901760
    %v338 = vsub.f32 %v52, %v337
    %339 = vmatpush1.msra.mxu0 %v338
    %340 = vmatprep.subr.mxu0 0.0
    %v341 = vand.u32 %v51, 4294901760
    %v342 = vsub.f32 %v51, %v341
    %343 = vmatpush1.msra.mxu0 %v342
    %344 = vmatprep.subr.mxu0 0.0
    %v345 = vand.u32 %v50, 4294901760
    %v346 = vsub.f32 %v50, %v345
    %347 = vmatpush1.msra.mxu0 %v346
    %348 = vmatprep.subr.mxu0 0.0
    %v349 = vand.u32 %v49, 4294901760
    %v350 = vsub.f32 %v49, %v349
    %351 = vmatpush1.msra.mxu0 %v350
    %352 = vmatprep.subr.mxu0 0.0
    %v353 = vand.u32 %v48, 4294901760
    %v354 = vsub.f32 %v48, %v353
    %355 = vmatpush1.msra.mxu0 %v354
    %356 = vmatprep.subr.mxu0 0.0
    %v357 = vand.u32 %v47, 4294901760
    %v358 = vsub.f32 %v47, %v357
    %359 = vmatpush1.msra.mxu0 %v358
    %360 = vmatprep.subr.mxu0 0.0
    %v361 = vand.u32 %v46, 4294901760
    %v362 = vsub.f32 %v46, %v361
    %363 = vmatpush1.msra.mxu0 %v362
    %364 = vmatprep.subr.mxu0 0.0
    %v365 = vand.u32 %v45, 4294901760
    %v366 = vsub.f32 %v45, %v365
    %367 = vmatpush1.msra.mxu0 %v366
    %368 = vmatprep.subr.mxu0 0.0
    %v369 = vand.u32 %v44, 4294901760
    %v370 = vsub.f32 %v44, %v369
    %371 = vmatpush1.msra.mxu0 %v370
    %372 = vmatprep.subr.mxu0 0.0
    %v373 = vand.u32 %v43, 4294901760
    %v374 = vsub.f32 %v43, %v373
    %375 = vmatpush1.msra.mxu0 %v374
    %376 = vmatprep.subr.mxu0 0.0
    %v377 = vand.u32 %v42, 4294901760
    %v378 = vsub.f32 %v42, %v377
    %379 = vmatpush1.msra.mxu0 %v378
    %380 = vmatprep.subr.mxu0 0.0
    %381 = vmatpush2.msra.mxu0 0.0
    %382 = vmatprep.subr.mxu0 0.0
    %383 = vmatpush2.msra.mxu0 0.0
    %384 = vmatprep.subr.mxu0 0.0
    %385 = vmatpush2.msra.mxu0 0.0
    %386 = vmatprep.subr.mxu0 0.0
    %387 = vmatpush2.msra.mxu0 0.0
    %388 = vmatprep.subr.mxu0 0.0
    %389 = vmatpush2.msra.mxu0 0.0
    %390 = vmatprep.subr.mxu0 0.0
    %391 = vmatpush2.msra.mxu0 0.0
    %392 = vmatprep.subr.mxu0 0.0
    %393 = vmatpush2.msra.mxu0 0.0
    %394 = vmatprep.subr.mxu0 0.0
    %395 = vmatpush2.msra.mxu0 0.0
    %396 = vmatprep.subr.mxu0 0.0
    %397 = vmatpush2.msra.mxu0 0.0
    %398 = vmatprep.subr.mxu0 0.0
    %399 = vmatpush2.msra.mxu0 0.0
    %400 = vmatprep.subr.mxu0 0.0
    %401 = vmatpush2.msra.mxu0 0.0
    %402 = vmatprep.subr.mxu0 0.0
    %403 = vmatpush2.msra.mxu0 0.0
    %404 = vmatprep.subr.mxu0 0.0
    %405 = vmatpush2.msra.mxu0 0.0
    %406 = vmatprep.subr.mxu0 0.0
    %407 = vmatpush2.msra.mxu0 0.0
    %408 = vmatprep.subr.mxu0 0.0
    %409 = vmatpush2.msra.mxu0 0.0
    %410 = vmatprep.subr.mxu0 0.0
    %411 = vmatpush2.msra.mxu0 0.0
    %412 = vmatprep.mubr.f32.mxu0 0.0
    %v413 = vand.u32 %v40, 4294901760
    %v414 = vsub.f32 %v40, %v413
    %415 = vmatmul.mubr.f32.gmra.mxu0 %v414
    %v416 = vpop.f32.mrf.mxu0
    %v417 = vadd.f32 %v307, %v416
    %v418 = vpop.f32.mrf.mxu0
    %419 = vmatprep.mubr.f32.mxu0 0.0
    %v420 = vand.u32 %v41, 4294901760
    %v421 = vsub.f32 %v41, %v420
    %422 = vmatmul.mubr.f32.gmra.mxu0 %v421
    %v423 = vpop.f32.mrf.mxu0
    %v424 = vadd.f32 %v313, %v423
    %v425 = vpop.f32.mrf.mxu0
    %426 = vdwg.mxu0
    %427 = vmatprep.subr.mxu0 0.0
    %v428 = vand.u32 %v57, 4294901760
    %429 = vmatpush1.msra.mxu0 %v428
    %430 = vmatprep.subr.mxu0 0.0
    %v431 = vand.u32 %v56, 4294901760
    %432 = vmatpush1.msra.mxu0 %v431
    %433 = vmatprep.subr.mxu0 0.0
    %v434 = vand.u32 %v55, 4294901760
    %435 = vmatpush1.msra.mxu0 %v434
    %436 = vmatprep.subr.mxu0 0.0
    %v437 = vand.u32 %v54, 4294901760
    %438 = vmatpush1.msra.mxu0 %v437
    %439 = vmatprep.subr.mxu0 0.0
    %v440 = vand.u32 %v53, 4294901760
    %441 = vmatpush1.msra.mxu0 %v440
    %442 = vmatprep.subr.mxu0 0.0
    %v443 = vand.u32 %v52, 4294901760
    %444 = vmatpush1.msra.mxu0 %v443
    %445 = vmatprep.subr.mxu0 0.0
    %v446 = vand.u32 %v51, 4294901760
    %447 = vmatpush1.msra.mxu0 %v446
    %448 = vmatprep.subr.mxu0 0.0
    %v449 = vand.u32 %v50, 4294901760
    %450 = vmatpush1.msra.mxu0 %v449
    %451 = vmatprep.subr.mxu0 0.0
    %v452 = vand.u32 %v49, 4294901760
    %453 = vmatpush1.msra.mxu0 %v452
    %454 = vmatprep.subr.mxu0 0.0
    %v455 = vand.u32 %v48, 4294901760
    %456 = vmatpush1.msra.mxu0 %v455
    %457 = vmatprep.subr.mxu0 0.0
    %v458 = vand.u32 %v47, 4294901760
    %459 = vmatpush1.msra.mxu0 %v458
    %460 = vmatprep.subr.mxu0 0.0
    %v461 = vand.u32 %v46, 4294901760
    %462 = vmatpush1.msra.mxu0 %v461
    %463 = vmatprep.subr.mxu0 0.0
    %v464 = vand.u32 %v45, 4294901760
    %465 = vmatpush1.msra.mxu0 %v464
    %466 = vmatprep.subr.mxu0 0.0
    %v467 = vand.u32 %v44, 4294901760
    %468 = vmatpush1.msra.mxu0 %v467
    %469 = vmatprep.subr.mxu0 0.0
    %v470 = vand.u32 %v43, 4294901760
    %471 = vmatpush1.msra.mxu0 %v470
    %472 = vmatprep.subr.mxu0 0.0
    %v473 = vand.u32 %v42, 4294901760
    %474 = vmatpush1.msra.mxu0 %v473
    %475 = vmatprep.subr.mxu0 0.0
    %476 = vmatpush2.msra.mxu0 0.0
    %477 = vmatprep.subr.mxu0 0.0
    %478 = vmatpush2.msra.mxu0 0.0
    %479 = vmatprep.subr.mxu0 0.0
    %480 = vmatpush2.msra.mxu0 0.0
    %481 = vmatprep.subr.mxu0 0.0
    %482 = vmatpush2.msra.mxu0 0.0
    %483 = vmatprep.subr.mxu0 0.0
    %484 = vmatpush2.msra.mxu0 0.0
    %485 = vmatprep.subr.mxu0 0.0
    %486 = vmatpush2.msra.mxu0 0.0
    %487 = vmatprep.subr.mxu0 0.0
    %488 = vmatpush2.msra.mxu0 0.0
    %489 = vmatprep.subr.mxu0 0.0
    %490 = vmatpush2.msra.mxu0 0.0
    %491 = vmatprep.subr.mxu0 0.0
    %492 = vmatpush2.msra.mxu0 0.0
    %493 = vmatprep.subr.mxu0 0.0
    %494 = vmatpush2.msra.mxu0 0.0
    %495 = vmatprep.subr.mxu0 0.0
    %496 = vmatpush2.msra.mxu0 0.0
    %497 = vmatprep.subr.mxu0 0.0
    %498 = vmatpush2.msra.mxu0 0.0
    %499 = vmatprep.subr.mxu0 0.0
    %500 = vmatpush2.msra.mxu0 0.0
    %501 = vmatprep.subr.mxu0 0.0
    %502 = vmatpush2.msra.mxu0 0.0
    %503 = vmatprep.subr.mxu0 0.0
    %504 = vmatpush2.msra.mxu0 0.0
    %505 = vmatprep.subr.mxu0 0.0
    %506 = vmatpush2.msra.mxu0 0.0
    %507 = vmatprep.mubr.f32.mxu0 0.0
    %v508 = vand.u32 %v40, 4294901760
    %v509 = vsub.f32 %v40, %v508
    %v510 = vand.u32 %v509, 4294901760
    %511 = vmatmul.mubr.f32.gmra.mxu0 %v510
    %v512 = vpop.f32.mrf.mxu0
    %v513 = vadd.f32 %v417, %v512
    %v514 = vpop.f32.mrf.mxu0
    %515 = vmatprep.mubr.f32.mxu0 0.0
    %v516 = vand.u32 %v41, 4294901760
    %v517 = vsub.f32 %v41, %v516
    %v518 = vand.u32 %v517, 4294901760
    %519 = vmatmul.mubr.f32.gmra.mxu0 %v518
    %v520 = vpop.f32.mrf.mxu0
    %v521 = vadd.f32 %v424, %v520
    %v522 = vpop.f32.mrf.mxu0
    %523 = vdwg.mxu0
    %524 = vmatprep.subr.mxu0 0.0
    %v525 = vand.u32 %v57, 4294901760
    %v526 = vsub.f32 %v57, %v525
    %v527 = vand.u32 %v526, 4294901760
    %528 = vmatpush1.msra.mxu0 %v527
    %529 = vmatprep.subr.mxu0 0.0
    %v530 = vand.u32 %v56, 4294901760
    %v531 = vsub.f32 %v56, %v530
    %v532 = vand.u32 %v531, 4294901760
    %533 = vmatpush1.msra.mxu0 %v532
    %534 = vmatprep.subr.mxu0 0.0
    %v535 = vand.u32 %v55, 4294901760
    %v536 = vsub.f32 %v55, %v535
    %v537 = vand.u32 %v536, 4294901760
    %538 = vmatpush1.msra.mxu0 %v537
    %539 = vmatprep.subr.mxu0 0.0
    %v540 = vand.u32 %v54, 4294901760
    %v541 = vsub.f32 %v54, %v540
    %v542 = vand.u32 %v541, 4294901760
    %543 = vmatpush1.msra.mxu0 %v542
    %544 = vmatprep.subr.mxu0 0.0
    %v545 = vand.u32 %v53, 4294901760
    %v546 = vsub.f32 %v53, %v545
    %v547 = vand.u32 %v546, 4294901760
    %548 = vmatpush1.msra.mxu0 %v547
    %549 = vmatprep.subr.mxu0 0.0
    %v550 = vand.u32 %v52, 4294901760
    %v551 = vsub.f32 %v52, %v550
    %v552 = vand.u32 %v551, 4294901760
    %553 = vmatpush1.msra.mxu0 %v552
    %554 = vmatprep.subr.mxu0 0.0
    %v555 = vand.u32 %v51, 4294901760
    %v556 = vsub.f32 %v51, %v555
    %v557 = vand.u32 %v556, 4294901760
    %558 = vmatpush1.msra.mxu0 %v557
    %559 = vmatprep.subr.mxu0 0.0
    %v560 = vand.u32 %v50, 4294901760
    %v561 = vsub.f32 %v50, %v560
    %v562 = vand.u32 %v561, 4294901760
    %563 = vmatpush1.msra.mxu0 %v562
    %564 = vmatprep.subr.mxu0 0.0
    %v565 = vand.u32 %v49, 4294901760
    %v566 = vsub.f32 %v49, %v565
    %v567 = vand.u32 %v566, 4294901760
    %568 = vmatpush1.msra.mxu0 %v567
    %569 = vmatprep.subr.mxu0 0.0
    %v570 = vand.u32 %v48, 4294901760
    %v571 = vsub.f32 %v48, %v570
    %v572 = vand.u32 %v571, 4294901760
    %573 = vmatpush1.msra.mxu0 %v572
    %574 = vmatprep.subr.mxu0 0.0
    %v575 = vand.u32 %v47, 4294901760
    %v576 = vsub.f32 %v47, %v575
    %v577 = vand.u32 %v576, 4294901760
    %578 = vmatpush1.msra.mxu0 %v577
    %579 = vmatprep.subr.mxu0 0.0
    %v580 = vand.u32 %v46, 4294901760
    %v581 = vsub.f32 %v46, %v580
    %v582 = vand.u32 %v581, 4294901760
    %583 = vmatpush1.msra.mxu0 %v582
    %584 = vmatprep.subr.mxu0 0.0
    %v585 = vand.u32 %v45, 4294901760
    %v586 = vsub.f32 %v45, %v585
    %v587 = vand.u32 %v586, 4294901760
    %588 = vmatpush1.msra.mxu0 %v587
    %589 = vmatprep.subr.mxu0 0.0
    %v590 = vand.u32 %v44, 4294901760
    %v591 = vsub.f32 %v44, %v590
    %v592 = vand.u32 %v591, 4294901760
    %593 = vmatpush1.msra.mxu0 %v592
    %594 = vmatprep.subr.mxu0 0.0
    %v595 = vand.u32 %v43, 4294901760
    %v596 = vsub.f32 %v43, %v595
    %v597 = vand.u32 %v596, 4294901760
    %598 = vmatpush1.msra.mxu0 %v597
    %599 = vmatprep.subr.mxu0 0.0
    %v600 = vand.u32 %v42, 4294901760
    %v601 = vsub.f32 %v42, %v600
    %v602 = vand.u32 %v601, 4294901760
    %603 = vmatpush1.msra.mxu0 %v602
    %604 = vmatprep.subr.mxu0 0.0
    %605 = vmatpush2.msra.mxu0 0.0
    %606 = vmatprep.subr.mxu0 0.0
    %607 = vmatpush2.msra.mxu0 0.0
    %608 = vmatprep.subr.mxu0 0.0
    %609 = vmatpush2.msra.mxu0 0.0
    %610 = vmatprep.subr.mxu0 0.0
    %611 = vmatpush2.msra.mxu0 0.0
    %612 = vmatprep.subr.mxu0 0.0
    %613 = vmatpush2.msra.mxu0 0.0
    %614 = vmatprep.subr.mxu0 0.0
    %615 = vmatpush2.msra.mxu0 0.0
    %616 = vmatprep.subr.mxu0 0.0
    %617 = vmatpush2.msra.mxu0 0.0
    %618 = vmatprep.subr.mxu0 0.0
    %619 = vmatpush2.msra.mxu0 0.0
    %620 = vmatprep.subr.mxu0 0.0
    %621 = vmatpush2.msra.mxu0 0.0
    %622 = vmatprep.subr.mxu0 0.0
    %623 = vmatpush2.msra.mxu0 0.0
    %624 = vmatprep.subr.mxu0 0.0
    %625 = vmatpush2.msra.mxu0 0.0
    %626 = vmatprep.subr.mxu0 0.0
    %627 = vmatpush2.msra.mxu0 0.0
    %628 = vmatprep.subr.mxu0 0.0
    %629 = vmatpush2.msra.mxu0 0.0
    %630 = vmatprep.subr.mxu0 0.0
    %631 = vmatpush2.msra.mxu0 0.0
    %632 = vmatprep.subr.mxu0 0.0
    %633 = vmatpush2.msra.mxu0 0.0
    %634 = vmatprep.subr.mxu0 0.0
    %635 = vmatpush2.msra.mxu0 0.0
    %636 = vmatprep.mubr.f32.mxu0 0.0
    %v637 = vand.u32 %v40, 4294901760
    %638 = vmatmul.mubr.f32.gmra.mxu0 %v637
    %v639 = vpop.f32.mrf.mxu0
    %v640 = vadd.f32 %v513, %v639
    %v641 = vpop.f32.mrf.mxu0
    %642 = vmatprep.mubr.f32.mxu0 0.0
    %v643 = vand.u32 %v41, 4294901760
    %644 = vmatmul.mubr.f32.gmra.mxu0 %v643
    %v645 = vpop.f32.mrf.mxu0
    %v646 = vadd.f32 %v521, %v645
    %v647 = vpop.f32.mrf.mxu0
    %648 = vdwg.mxu0
    %649 = vmatprep.subr.mxu0 0.0
    %v650 = vand.u32 %v57, 4294901760
    %651 = vmatpush1.msra.mxu0 %v650
    %652 = vmatprep.subr.mxu0 0.0
    %v653 = vand.u32 %v56, 4294901760
    %654 = vmatpush1.msra.mxu0 %v653
    %655 = vmatprep.subr.mxu0 0.0
    %v656 = vand.u32 %v55, 4294901760
    %657 = vmatpush1.msra.mxu0 %v656
    %658 = vmatprep.subr.mxu0 0.0
    %v659 = vand.u32 %v54, 4294901760
    %660 = vmatpush1.msra.mxu0 %v659
    %661 = vmatprep.subr.mxu0 0.0
    %v662 = vand.u32 %v53, 4294901760
    %663 = vmatpush1.msra.mxu0 %v662
    %664 = vmatprep.subr.mxu0 0.0
    %v665 = vand.u32 %v52, 4294901760
    %666 = vmatpush1.msra.mxu0 %v665
    %667 = vmatprep.subr.mxu0 0.0
    %v668 = vand.u32 %v51, 4294901760
    %669 = vmatpush1.msra.mxu0 %v668
    %670 = vmatprep.subr.mxu0 0.0
    %v671 = vand.u32 %v50, 4294901760
    %672 = vmatpush1.msra.mxu0 %v671
    %673 = vmatprep.subr.mxu0 0.0
    %v674 = vand.u32 %v49, 4294901760
    %675 = vmatpush1.msra.mxu0 %v674
    %676 = vmatprep.subr.mxu0 0.0
    %v677 = vand.u32 %v48, 4294901760
    %678 = vmatpush1.msra.mxu0 %v677
    %679 = vmatprep.subr.mxu0 0.0
    %v680 = vand.u32 %v47, 4294901760
    %681 = vmatpush1.msra.mxu0 %v680
    %682 = vmatprep.subr.mxu0 0.0
    %v683 = vand.u32 %v46, 4294901760
    %684 = vmatpush1.msra.mxu0 %v683
    %685 = vmatprep.subr.mxu0 0.0
    %v686 = vand.u32 %v45, 4294901760
    %687 = vmatpush1.msra.mxu0 %v686
    %688 = vmatprep.subr.mxu0 0.0
    %v689 = vand.u32 %v44, 4294901760
    %690 = vmatpush1.msra.mxu0 %v689
    %691 = vmatprep.subr.mxu0 0.0
    %v692 = vand.u32 %v43, 4294901760
    %693 = vmatpush1.msra.mxu0 %v692
    %694 = vmatprep.subr.mxu0 0.0
    %v695 = vand.u32 %v42, 4294901760
    %696 = vmatpush1.msra.mxu0 %v695
    %697 = vmatprep.subr.mxu0 0.0
    %698 = vmatpush2.msra.mxu0 0.0
    %699 = vmatprep.subr.mxu0 0.0
    %700 = vmatpush2.msra.mxu0 0.0
    %701 = vmatprep.subr.mxu0 0.0
    %702 = vmatpush2.msra.mxu0 0.0
    %703 = vmatprep.subr.mxu0 0.0
    %704 = vmatpush2.msra.mxu0 0.0
    %705 = vmatprep.subr.mxu0 0.0
    %706 = vmatpush2.msra.mxu0 0.0
    %707 = vmatprep.subr.mxu0 0.0
    %708 = vmatpush2.msra.mxu0 0.0
    %709 = vmatprep.subr.mxu0 0.0
    %710 = vmatpush2.msra.mxu0 0.0
    %711 = vmatprep.subr.mxu0 0.0
    %712 = vmatpush2.msra.mxu0 0.0
    %713 = vmatprep.subr.mxu0 0.0
    %714 = vmatpush2.msra.mxu0 0.0
    %715 = vmatprep.subr.mxu0 0.0
    %716 = vmatpush2.msra.mxu0 0.0
    %717 = vmatprep.subr.mxu0 0.0
    %718 = vmatpush2.msra.mxu0 0.0
    %719 = vmatprep.subr.mxu0 0.0
    %720 = vmatpush2.msra.mxu0 0.0
    %721 = vmatprep.subr.mxu0 0.0
    %722 = vmatpush2.msra.mxu0 0.0
    %723 = vmatprep.subr.mxu0 0.0
    %724 = vmatpush2.msra.mxu0 0.0
    %725 = vmatprep.subr.mxu0 0.0
    %726 = vmatpush2.msra.mxu0 0.0
    %727 = vmatprep.subr.mxu0 0.0
    %728 = vmatpush2.msra.mxu0 0.0
    %729 = vmatprep.mubr.f32.mxu0 0.0
    %v730 = vand.u32 %v40, 4294901760
    %731 = vmatmul.mubr.f32.gmra.mxu0 %v730
    %v732 = vpop.f32.mrf.mxu0
    %v733 = vadd.f32 %v640, %v732
    %v734 = vpop.f32.mrf.mxu0
    %735 = vmatprep.mubr.f32.mxu0 0.0
    %v736 = vand.u32 %v41, 4294901760
    %737 = vmatmul.mubr.f32.gmra.mxu0 %v736
    %v738 = vpop.f32.mrf.mxu0
    %v739 = vadd.f32 %v646, %v738
    %v740 = vpop.f32.mrf.mxu0
    %741 = vdwg.mxu0
    %v742 = vld [vmem:[%s2] sm:$0xff]
    %v743 = vld [vmem:[%s2 + $0x8] sm:$0x3]
    %vm744 = vcmp.gt.f32.partialorder %v742, 0.0
    %vm745 = vcmp.gt.f32.partialorder %v743, 0.0
    %v746 = vsub.f32 2.0, %v733
    %v747 = vsub.f32 2.0, %v739
    %v748 = vmax.f32 %v746, 0.0
    %v749 = vmax.f32 %v747, 0.0
    %v750 = vsel %vm744, %v733, %v748
    %v751 = vsel %vm745, %v739, %v749
    %v752 = vlaneseq
    %v753 = vshrl.u32 %v752, 7
    %v754 = vadd.s32 %v753, 8
    %v755 = vlaneseq
    %v756 = vand.u32 %v755, 127
    %s757 = smul.u32 0, 10
    %v758 = vstv %s757
    %v759 = vadd.s32 %v758, %v753
    %v760 = vadd.s32 %v758, %v754
    %v761 = vmul.u32 %v759, 4
    %v762 = vmul.u32 %v760, 4
    %v763 = vadd.s32 %v761, %v756
    %v764 = vadd.s32 %v762, %v756
    %vm765 = vcmp.lt.s32.totalorder %v763, 37
    %vm766 = vcmp.lt.s32.totalorder %v764, 37
    %v767 = vsel %vm765, %v750, 0.0
    %v768 = vsel %vm766, %v751, 0.0
    %v769 = vld [vmem:[#allocation2] sm:$0x1]
    %vm770 = vcmask 31744
    %v771 = vsel %vm770, %v767, 0.0
    %vm772 = vcmask 25600
    %v773 = vsel %vm772, %v768, 0.0
    %v774 = vadd.f32 %v771, %v773
    %775 = vadd.xlane.f32.xlu0 %v774
    %v776 = vpop.xlane.xlu0 %775
    %v777 = vrot.slane %v776, 4
    %v778 = vadd.f32 %v776, %v777
    %v779 = vrot.slane %v778, 2
    %v780 = vadd.f32 %v778, %v779
    %v781 = vrot.slane %v780, 1
    %v782 = vadd.f32 %v780, %v781
    %s783 = vtos %v782
    %v784 = vstv %s783
    %v785 = vadd.f32 %v769, %v784
    %vm786 = vcmask 0
    %787 = vst.msk [vmem:[#allocation2] sm:$0x1] %vm786, %v785
    // Predicated region
    $region22: #{tpu_custom_call.1} parent=1 // pred_check
      %p788 = pneg %p18
    $region23: #{tpu_custom_call.1} parent=1 // pred_check_branch
      %790 = sbr.rel (%p788) target = $region25
    $region24: #{tpu_custom_call.1} parent=1 // pred_region
      %v791 = vld [vmem:[#allocation2] sm:$0x1]
      %v792 = vrcp.pop 37.0
      %v793 = vmul.f32 %v791, %v792
      %794 = vst.msk [vmem:[#allocation3] sm:$0x1] %vm786, %v793
    $region25: #{tpu_custom_call.1} parent=1 // pred_fallthru
      _
    // Predicated region
    $region26: #{tpu_custom_call.1} parent=1 // pred_check
      _
    $region27: #{tpu_custom_call.1} parent=1 // pred_check_branch
      %796 = sbr.rel (0) target = $region29
    $region28: #{tpu_custom_call.1} parent=1 // pred_region
      %s798 = ssub.s32 16, 16
      %799 = vsyncadd [#allocation4], %s798
      %s801 = sshll.u32 [#allocation3], 4
      %s802 = int_to_ptr.vmem [resolvable:$true] %s801
      %804 = dma.vmem_to_hbm [thread:$0]  %s802, 16, %s4, [#allocation4]
    $region29: #{tpu_custom_call.1} parent=1 // pred_fallthru
      _
    // Predicated region
    $region30: #{tpu_custom_call.1} parent=1 // pred_check
      _
    $region31: #{tpu_custom_call.1} parent=1 // pred_check_branch
      %806 = sbr.rel (0) target = $region33
    $region32: #{tpu_custom_call.1} parent=1 // pred_region
      %807 = dma.done [#allocation4], 16
    $region33: #{tpu_custom_call.1} parent=1 // pred_fallthru
      _
    %808 = vsyncpa [#allocation4], 1

</llo_original>
